<compile_context>
chip_gen: v7x
topology: tpu7x:2x2x1
jax: 0.10.0
libtpu: 0.0.40
codegen_flags: <defaults>
</compile_context>

<pallas_src>
import jax
import jax.numpy as jnp
from jax import lax
from jax.experimental import pallas as pl
from jax.experimental.pallas import tpu as pltpu

_LANE = 128
# ~4 MiB per block: 2x input bufs + 2x output bufs ~= 16 MiB VMEM.
_TARGET_BLOCK_BYTES = 4 * 1024 * 1024
# Headroom over the double-buffered 16 MiB + internal scratch; <= physical VMEM
# on every generation (v7x: 64 MiB/TC, v5e/v6e: 128 MiB).
_VMEM_LIMIT_BYTES = 40 << 20


def _round_up(v: int, m: int) -> int:
    return ((v + m - 1) // m) * m


def _h_sigmoid_kernel(x_ref, o_ref):
    x = x_ref[...]
    inv6 = jnp.asarray(1.0 / 6.0, dtype=x.dtype)
    # relu6(x + 3) * (1/6), in the native dtype (no silent f32 upcast).
    o_ref[...] = (jnp.clip(x + 3.0, 0.0, 6.0) * inv6).astype(o_ref.dtype)


def _h_sigmoid_slab(slab: jax.Array, *, inplace: bool = False) -> jax.Array:
    """Run the kernel on a lane-dense (rows, 128) slab."""
    rows, lane = slab.shape
    itemsize = jnp.dtype(slab.dtype).itemsize

    # Row tile targeting ~_TARGET_BLOCK_BYTES; a multiple of 32 satisfies the
    # sublane minimum for f32 (8), bf16 (16) and int8/fp8 (32).
    tr = max(_TARGET_BLOCK_BYTES // (lane * itemsize), 32)
    tr = (tr // 32) * 32

    # Guarantee >= 2 grid steps whenever the slab is big enough to split into
    # 32-row tiles, so ("parallel",) shards across both v7x TensorCores.
    two_way = _round_up(pl.cdiv(rows, 2), 32)
    if two_way < rows:
        tr = min(tr, two_way)
    elif tr > rows:
        tr = rows  # single full-array block (always a legal block shape)

    grid = (pl.cdiv(rows, tr),)  # ragged last block is masked by Pallas

    n_elems = rows * lane
    cost = pl.CostEstimate(
        flops=4 * n_elems,                      # add + clip(2) + mul
        transcendentals=0,
        bytes_accessed=2 * n_elems * itemsize,  # 1 HBM read + 1 HBM write
    )

    return pl.pallas_call(
        _h_sigmoid_kernel,
        out_shape=jax.ShapeDtypeStruct((rows, lane), slab.dtype),
        grid_spec=pltpu.PrefetchScalarGridSpec(
            num_scalar_prefetch=0,
            grid=grid,
            in_specs=[pl.BlockSpec((tr, lane), lambda i: (i, 0))],
            out_specs=pl.BlockSpec((tr, lane), lambda i: (i, 0)),
        ),
        compiler_params=pltpu.CompilerParams(
            dimension_semantics=("parallel",),
            vmem_limit_bytes=_VMEM_LIMIT_BYTES,
        ),
        cost_estimate=cost,
        # With a donated input this reuses the input HBM buffer (no extra
        # full-tensor allocation); without donation XLA copy-protects it.
        input_output_aliases=({0: 0} if inplace else {}),
    )(slab)


def h_sigmoid(x: jax.Array, *, inplace: bool = False) -> jax.Array:
    """Elementwise hard-sigmoid relu6(x+3)/6 on any layout (NCHW expected)."""
    orig_shape = x.shape
    n = x.size
    flat = x.reshape(-1)
    n_bulk = (n // _LANE) * _LANE

    if n_bulk == n:
        # Fast path (common for conv feature maps): no pad, no slice —
        # exactly one HBM read + one HBM write.
        out = _h_sigmoid_slab(flat.reshape(n // _LANE, _LANE), inplace=inplace)
        return out.reshape(orig_shape)

    # Ragged total size: kernel on the 128-aligned bulk, <128-element tail in
    # plain JAX, stitched with scatter-updates instead of a full-tensor
    # concatenate (which would re-read + re-write everything).
    inv6 = jnp.asarray(1.0 / 6.0, dtype=x.dtype)
    tail_out = jnp.clip(flat[n_bulk:] + 3.0, 0.0, 6.0) * inv6
    if n_bulk == 0:
        return tail_out.reshape(orig_shape)
    bulk_out = _h_sigmoid_slab(flat[:n_bulk].reshape(n_bulk // _LANE, _LANE))
    out_flat = jnp.zeros((n,), dtype=x.dtype)
    out_flat = lax.dynamic_update_slice(out_flat, bulk_out.reshape(-1), (0,))
    out_flat = lax.dynamic_update_slice(out_flat, tail_out, (n_bulk,))
    return out_flat.reshape(orig_shape)


if __name__ == "__main__":
    key = jax.random.PRNGKey(0)

    def ref(v):
        return jnp.clip(v + 3.0, 0.0, 6.0) / 6.0

    # 1) NCHW f32 input, small shape consistent with the module (single block).
    x = jax.random.normal(key, (2, 4, 16, 16), dtype=jnp.float32) * 4.0
    y = jax.block_until_ready(h_sigmoid(x))
    assert y.shape == x.shape and y.dtype == x.dtype
    assert jnp.allclose(y, ref(x), atol=1e-5), "f32 mismatch vs reference"

    # 2) Multi-step grid with a masked ragged last row-block (100 rows -> 64+36).
    x2 = jax.random.normal(jax.random.PRNGKey(1), (2, 4, 40, 40), jnp.float32) * 4.0
    y2 = jax.block_until_ready(h_sigmoid(x2))
    assert y2.shape == x2.shape and jnp.allclose(y2, ref(x2), atol=1e-5)

    # 3) Ragged total element count (not a multiple of 128).
    x3 = jax.random.normal(jax.random.PRNGKey(2), (3, 5, 7, 11), jnp.float32) * 4.0
    y3 = jax.block_until_ready(h_sigmoid(x3))
    assert y3.shape == x3.shape and jnp.allclose(y3, ref(x3), atol=1e-5)

    # 4) bf16 path (dtype-aware tiling, native-dtype compute).
    xb = x.astype(jnp.bfloat16)
    yb = jax.block_until_ready(h_sigmoid(xb))
    assert yb.dtype == jnp.bfloat16
    assert jnp.allclose(yb.astype(jnp.float32), ref(xb).astype(jnp.float32), atol=2e-2)

    print("KERNEL_OK")
</pallas_src>

<mosaic_0001>
module attributes {stable_mosaic.version = 11 : i64} {
  func.func @_h_sigmoid_kernel(%arg0: i32, %arg1: memref<16x128xf32, #tpu.memory_space<vmem>>, %arg2: memref<16x128xf32, #tpu.memory_space<vmem>>) attributes {dimension_semantics = [#tpu.dimension_semantics<parallel>], iteration_bounds = array<i64: 1>, scalar_prefetch = 0 : i64, scratch_operands = 0 : i64, tpu.core_type = #tpu.core_type<tc>, window_params = [{transform_indices = @transform_0, window_bounds = array<i64: 16, 128>}, {transform_indices = @transform_1, window_bounds = array<i64: 16, 128>}]} {
    %c0 = arith.constant 0 : index
    %c0_0 = arith.constant 0 : index
    %0 = vector.load %arg1[%c0, %c0_0] : memref<16x128xf32, #tpu.memory_space<vmem>>, vector<16x128xf32>
    %cst = arith.constant 3.000000e+00 : f32
    %1 = vector.broadcast %cst : f32 to vector<16x128xf32>
    %2 = arith.addf %0, %1 : vector<16x128xf32>
    %cst_1 = arith.constant 0.000000e+00 : f32
    %cst_2 = arith.constant 6.000000e+00 : f32
    %3 = vector.broadcast %cst_1 : f32 to vector<16x128xf32>
    %4 = arith.maximumf %3, %2 : vector<16x128xf32>
    %5 = vector.broadcast %cst_2 : f32 to vector<16x128xf32>
    %6 = arith.minimumf %5, %4 : vector<16x128xf32>
    %cst_3 = arith.constant 0.166666672 : f32
    %7 = vector.broadcast %cst_3 : f32 to vector<16x128xf32>
    %8 = arith.mulf %6, %7 : vector<16x128xf32>
    %c0_4 = arith.constant 0 : index
    %c0_5 = arith.constant 0 : index
    %9 = vector.load %arg2[%c0_4, %c0_5] : memref<16x128xf32, #tpu.memory_space<vmem>>, vector<16x128xf32>
    tpu.vector_store %arg2[%c0_4, %c0_5], %8 {strides = array<i32>} : memref<16x128xf32, #tpu.memory_space<vmem>>, vector<16x128xf32>,
    return
  }
  func.func @transform_0(%arg0: i32) -> (i32, i32) {
    %c0_i32 = arith.constant 0 : i32
    %c0_i32_0 = arith.constant 0 : i32
    return %arg0, %c0_i32 : i32, i32
  }
  func.func @transform_1(%arg0: i32) -> (i32, i32) {
    %c0_i32 = arith.constant 0 : i32
    %c0_i32_0 = arith.constant 0 : i32
    return %arg0, %c0_i32 : i32, i32
  }
}

</mosaic_0001>

<llo_original>
// kernel: tpu_custom_call.1
$region0: #{tpu_custom_call.1}
  #allocation0 [shape = 'u32[]', space=smem, size = 0x4, offset = 0x4, fixed_abs, tag = 'smem constant byte address 0x4 - core index']
  #allocation1 [shape = 'u32[144,128]{1,0:T(1,128)}', space=vmem, size = 0x12000, scoped, tag = 'internal scratch']
  %s0 = inlined_call_operand.hbm [shape: f32[16,128], index: 0, kind: input, shape index: {}]
  %s1 = inlined_call_operand.hbm [shape: f32[16,128], index: 1, kind: output, shape index: {}]
  %s2 = sld [smem:[#allocation0]]
  $region18: #{tpu_custom_call.1} parent=0
    _
  %s4 = ssub.s32 1, %s2
  %s5 = scalar_select 0, %s4, %s2
  $region1: #{tpu_custom_call.1} parent=0
    #allocation2 [shape = 'u8[8192]{0}', space=vmem, size = 0x2000, scoped, tag = 'input window, operand 0, single buffered']
    #allocation3 [shape = 's32[1]{0}', space=sflag, size = 0x4, scoped, tag = 'scoped memory for tpu_custom_call.1']
    #allocation4 [shape = 's32[1]{0}', space=sflag, size = 0x4, scoped, tag = 'scoped memory for tpu_custom_call.1']
    #allocation5 [shape = 'u8[8192]{0}', space=vmem, size = 0x2000, scoped, tag = 'output window, operand 0, single buffered']
    %6 = vsyncpa [#allocation3], 0
    %7 = vsyncpa [#allocation4], 0
    // Predicated region
    $region2: #{tpu_custom_call.1} parent=1 // pred_check
      _
    $region3: #{tpu_custom_call.1} parent=1 // pred_check_branch
      %9 = sbr.rel (0) target = $region5
    $region4: #{tpu_custom_call.1} parent=1 // pred_region
      %s11 = ssub.s32 256, 256
      %12 = vsyncadd [#allocation3], %s11
      %s13 = sshll.u32 [#allocation2], 4
      %s14 = int_to_ptr.vmem [resolvable:$true] %s13
      %19 = dma.hbm_to_vmem [thread:$0]  %s0, 256, %s14, [#allocation3], 128, 128, 8
    $region5: #{tpu_custom_call.1} parent=1 // pred_fallthru
      _
    // Predicated region
    $region6: #{tpu_custom_call.1} parent=1 // pred_check
      _
    $region7: #{tpu_custom_call.1} parent=1 // pred_check_branch
      %21 = sbr.rel (0) target = $region9
    $region8: #{tpu_custom_call.1} parent=1 // pred_region
      %22 = dma.done [#allocation3], 256
    $region9: #{tpu_custom_call.1} parent=1 // pred_fallthru
      _
    %v23 = vld [vmem:[#allocation2] sm:$0xff]
    %v24 = vld [vmem:[#allocation2 + $0x8] sm:$0xff]
    %v25 = vadd.f32 %v23, 3.0
    %v26 = vadd.f32 %v24, 3.0
    %v27 = vmax.f32 %v25, 0.0
    %v28 = vmax.f32 %v26, 0.0
    %v29 = vmin.f32 %v27, 6.0
    %v30 = vmin.f32 %v28, 6.0
    %v31 = vmul.f32 %v29, 0.16666667
    %v32 = vmul.f32 %v30, 0.16666667
    %33 = vst [vmem:[#allocation5] sm:$0xff] %v31
    %34 = vst [vmem:[#allocation5 + $0x8] sm:$0xff] %v32
    // Predicated region
    $region10: #{tpu_custom_call.1} parent=1 // pred_check
      _
    $region11: #{tpu_custom_call.1} parent=1 // pred_check_branch
      %36 = sbr.rel (0) target = $region13
    $region12: #{tpu_custom_call.1} parent=1 // pred_region
      %s38 = ssub.s32 256, 256
      %39 = vsyncadd [#allocation4], %s38
      %s40 = sshll.u32 [#allocation5], 4
      %s41 = int_to_ptr.vmem [resolvable:$true] %s40
      %46 = dma.vmem_to_hbm [thread:$0]  %s41, 256, %s1, [#allocation4], 128, 128, 8
    $region13: #{tpu_custom_call.1} parent=1 // pred_fallthru
      _
    // Predicated region
    $region14: #{tpu_custom_call.1} parent=1 // pred_check
      _
    $region15: #{tpu_custom_call.1} parent=1 // pred_check_branch
      %48 = sbr.rel (0) target = $region17
    $region16: #{tpu_custom_call.1} parent=1 // pred_region
      %49 = dma.done [#allocation4], 256
    $region17: #{tpu_custom_call.1} parent=1 // pred_fallthru
      _
    %50 = vsyncpa [#allocation3], 1
    %51 = vsyncpa [#allocation4], 1

</llo_original>
